<compile_context>
chip_gen: v7x
topology: tpu7x:2x2x1
jax: 0.10.0
libtpu: 0.0.40
codegen_flags: <defaults>
</compile_context>

<pallas_src>
import math
import functools

import jax
import jax.numpy as jnp
from jax import lax
from jax.experimental import pallas as pl
from jax.experimental.pallas import tpu as pltpu


# ---------------------------------------------------------------------------
# Parameter ("buffer") setup: deterministic sinusoidal positional encoding.
# ---------------------------------------------------------------------------
def make_pe(d_model: int, max_len: int = 5000, dtype=jnp.float32) -> jnp.ndarray:
    position = jnp.arange(max_len, dtype=jnp.float32)[:, None]            # (max_len, 1)
    div_term = jnp.exp(
        jnp.arange(0, d_model, 2, dtype=jnp.float32) * (-math.log(10000.0) / d_model)
    )                                                                      # (d_model/2,)
    pe = jnp.zeros((max_len, d_model), dtype=jnp.float32)
    pe = pe.at[:, 0::2].set(jnp.sin(position * div_term))
    pe = pe.at[:, 1::2].set(jnp.cos(position * div_term))
    return pe.astype(dtype)                                                # (max_len, d_model)


# ---------------------------------------------------------------------------
# Kernels
# ---------------------------------------------------------------------------
def pe_add_kernel(x_ref, pe_ref, o_ref):
    # eval-mode forward: elementwise add of the positional encoding (dropout = identity)
    # pe block is (1, tile_l); broadcasts over the batch-tile (sublane) rows.
    o_ref[...] = x_ref[...] + pe_ref[...]


def _hash_bits_u32(shape, row_off, col_off, n_cols, seed):
    # Stateless per-element uint32 hash (lowbias32 finalizer) keyed on the global
    # (row, col) position and the seed.  Pure VPU integer ops; no TPU-only prims.
    r = lax.broadcasted_iota(jnp.int32, shape, 0).astype(jnp.uint32) + row_off
    c = lax.broadcasted_iota(jnp.int32, shape, 1).astype(jnp.uint32) + col_off
    h = r * n_cols + c                       # unique linear index (mod 2^32)
    h = h * jnp.uint32(0x9E3779B1) + seed
    h = h ^ (h >> jnp.uint32(16))
    h = h * jnp.uint32(0x7FEB352D)
    h = h ^ (h >> jnp.uint32(15))
    h = h * jnp.uint32(0x846CA68B)
    h = h ^ (h >> jnp.uint32(16))
    return h


def pe_add_dropout_kernel(seed_ref, x_ref, pe_ref, o_ref, *,
                          p: float, n_cols: int, tile_b: int, tile_l: int):
    # training-mode forward: add PE, then inverted dropout (keep prob 1-p, scale 1/(1-p)).
    y = x_ref[...] + pe_ref[...]
    bt = pl.program_id(0)
    lt = pl.program_id(1)
    # scalar-unit seed/offset derivation; unique stream per global element.
    row_off = (bt * tile_b).astype(jnp.uint32)
    col_off = (lt * tile_l).astype(jnp.uint32)
    seed = seed_ref[0].astype(jnp.uint32)
    bits = _hash_bits_u32(y.shape, row_off, col_off, jnp.uint32(n_cols), seed)
    # integer-threshold compare: P(bits >= threshold) = 1 - p
    threshold = jnp.uint32(min(int(round(p * 4294967296.0)), 4294967295))
    keep = bits >= threshold
    scale = jnp.asarray(1.0 / (1.0 - p), dtype=y.dtype)
    zero = jnp.asarray(0.0, dtype=y.dtype)
    o_ref[...] = (y * jnp.where(keep, scale, zero)).astype(o_ref.dtype)


# ---------------------------------------------------------------------------
# Tiling helper: lane-dense blocks, ~2 MiB per x block.
# ---------------------------------------------------------------------------
def _choose_tiles(bs: int, n_cols: int, itemsize: int):
    target_elems = max(128, (2 * 1024 * 1024) // max(itemsize, 1))   # ~2 MiB / block
    tile_b = bs if bs <= 8 else 8                                     # full dim or mult of 8
    if n_cols <= 128:
        tile_l = n_cols                                               # full dim: always legal
    else:
        cap = max(128, ((target_elems // tile_b) // 128) * 128)
        tile_l = min(cap, (n_cols // 128) * 128)                      # multiple of 128
    return tile_b, tile_l


# ---------------------------------------------------------------------------
# Wrappers
# ---------------------------------------------------------------------------
def positional_encoding_eval(x: jnp.ndarray, pe: jnp.ndarray) -> jnp.ndarray:
    bs, seq_len, d_model = x.shape
    n_cols = seq_len * d_model
    x2 = x.reshape(bs, n_cols)                                        # contiguous -> free
    pe2 = pe[:seq_len, :].astype(x.dtype).reshape(1, n_cols)
    tile_b, tile_l = _choose_tiles(bs, n_cols, x.dtype.itemsize)
    grid = (pl.cdiv(bs, tile_b), pl.cdiv(n_cols, tile_l))
    out = pl.pallas_call(
        pe_add_kernel,
        out_shape=jax.ShapeDtypeStruct((bs, n_cols), x.dtype),
        grid_spec=pltpu.PrefetchScalarGridSpec(
            num_scalar_prefetch=0,
            grid=grid,
            in_specs=[
                pl.BlockSpec((tile_b, tile_l), lambda b, l: (b, l)),
                pl.BlockSpec((1, tile_l), lambda b, l: (0, l)),
            ],
            out_specs=pl.BlockSpec((tile_b, tile_l), lambda b, l: (b, l)),
        ),
        compiler_params=pltpu.CompilerParams(
            dimension_semantics=("parallel", "parallel")),
    )(x2, pe2)
    return out.reshape(bs, seq_len, d_model)


def positional_encoding_train(x: jnp.ndarray, pe: jnp.ndarray, seed: int,
                              p: float = 0.1) -> jnp.ndarray:
    if p <= 0.0:
        return positional_encoding_eval(x, pe)
    if p >= 1.0:
        return jnp.zeros_like(x)                                      # torch Dropout(p=1)
    bs, seq_len, d_model = x.shape
    n_cols = seq_len * d_model
    x2 = x.reshape(bs, n_cols)
    pe2 = pe[:seq_len, :].astype(x.dtype).reshape(1, n_cols)
    tile_b, tile_l = _choose_tiles(bs, n_cols, x.dtype.itemsize)
    grid = (pl.cdiv(bs, tile_b), pl.cdiv(n_cols, tile_l))
    seed_arr = jnp.array([seed], dtype=jnp.int32)
    kernel = functools.partial(pe_add_dropout_kernel, p=float(p), n_cols=n_cols,
                               tile_b=tile_b, tile_l=tile_l)
    out = pl.pallas_call(
        kernel,
        out_shape=jax.ShapeDtypeStruct((bs, n_cols), x.dtype),
        grid_spec=pltpu.PrefetchScalarGridSpec(
            num_scalar_prefetch=1,                # seed lands in SMEM as first kernel arg
            grid=grid,
            in_specs=[
                pl.BlockSpec((tile_b, tile_l), lambda b, l, seed: (b, l)),
                pl.BlockSpec((1, tile_l), lambda b, l, seed: (0, l)),
            ],
            out_specs=pl.BlockSpec((tile_b, tile_l), lambda b, l, seed: (b, l)),
        ),
        compiler_params=pltpu.CompilerParams(
            dimension_semantics=("parallel", "parallel")),
    )(seed_arr, x2, pe2)
    return out.reshape(bs, seq_len, d_model)


# ---------------------------------------------------------------------------
# Main
# ---------------------------------------------------------------------------
if __name__ == "__main__":
    bs, seq_len, d_model = 2, 8, 32
    max_len = 64  # module default is 5000; only the first seq_len rows are used

    key = jax.random.PRNGKey(0)
    x = jax.random.normal(key, (bs, seq_len, d_model), dtype=jnp.float32)
    pe = make_pe(d_model, max_len=max_len)
    ref = x + pe[None, :seq_len, :]

    # Eval-mode (deterministic) path: exact semantics x + pe[:seq_len]
    out_eval = jax.block_until_ready(positional_encoding_eval(x, pe))
    assert out_eval.shape == (bs, seq_len, d_model)
    assert jnp.allclose(out_eval, ref, atol=1e-6, rtol=1e-6), "eval mismatch vs reference"

    # Training-mode path (dropout p=0.1): every element is either 0 (dropped)
    # or (x + pe) * 1/(1-p) (kept).
    p = 0.1
    out_train = jax.block_until_ready(positional_encoding_train(x, pe, seed=0, p=p))
    assert out_train.shape == (bs, seq_len, d_model)
    assert bool(jnp.all(jnp.isfinite(out_train)))
    ref_scaled = ref * (1.0 / (1.0 - p))
    ok = jnp.logical_or(out_train == 0.0,
                        jnp.isclose(out_train, ref_scaled, atol=1e-5, rtol=1e-5))
    assert bool(jnp.all(ok)), "train output is neither dropped nor correctly scaled"
    drop_frac = float(jnp.mean((out_train == 0.0).astype(jnp.float32)))
    assert 0.0 < drop_frac < 0.5, f"implausible drop fraction {drop_frac}"

    print("KERNEL_OK")
</pallas_src>

<mosaic_0001>
module attributes {stable_mosaic.version = 11 : i64} {
  func.func @pe_add_kernel(%arg0: i32, %arg1: i32, %arg2: memref<2x256xf32, #tpu.memory_space<vmem>>, %arg3: memref<1x256xf32, #tpu.memory_space<vmem>>, %arg4: memref<2x256xf32, #tpu.memory_space<vmem>>) attributes {dimension_semantics = [#tpu.dimension_semantics<parallel>, #tpu.dimension_semantics<parallel>], iteration_bounds = array<i64: 1, 1>, scalar_prefetch = 0 : i64, scratch_operands = 0 : i64, tpu.core_type = #tpu.core_type<tc>, window_params = [{transform_indices = @transform_0, window_bounds = array<i64: 2, 256>}, {transform_indices = @transform_1, window_bounds = array<i64: 1, 256>}, {transform_indices = @transform_2, window_bounds = array<i64: 2, 256>}]} {
    %c0 = arith.constant 0 : index
    %c0_0 = arith.constant 0 : index
    %0 = vector.load %arg2[%c0, %c0_0] : memref<2x256xf32, #tpu.memory_space<vmem>>, vector<2x256xf32>
    %c0_1 = arith.constant 0 : index
    %c0_2 = arith.constant 0 : index
    %1 = vector.load %arg3[%c0_1, %c0_2] : memref<1x256xf32, #tpu.memory_space<vmem>>, vector<1x256xf32>
    %2 = vector.broadcast %1 : vector<1x256xf32> to vector<2x256xf32>
    %3 = arith.addf %0, %2 : vector<2x256xf32>
    %c0_3 = arith.constant 0 : index
    %c0_4 = arith.constant 0 : index
    %4 = vector.load %arg4[%c0_3, %c0_4] : memref<2x256xf32, #tpu.memory_space<vmem>>, vector<2x256xf32>
    tpu.vector_store %arg4[%c0_3, %c0_4], %3 {strides = array<i32>} : memref<2x256xf32, #tpu.memory_space<vmem>>, vector<2x256xf32>,
    return
  }
  func.func @transform_0(%arg0: i32, %arg1: i32) -> (i32, i32) {
    %c0_i32 = arith.constant 0 : i32
    return %arg0, %arg1 : i32, i32
  }
  func.func @transform_1(%arg0: i32, %arg1: i32) -> (i32, i32) {
    %c0_i32 = arith.constant 0 : i32
    %c0_i32_0 = arith.constant 0 : i32
    return %c0_i32, %arg1 : i32, i32
  }
  func.func @transform_2(%arg0: i32, %arg1: i32) -> (i32, i32) {
    %c0_i32 = arith.constant 0 : i32
    return %arg0, %arg1 : i32, i32
  }
}

</mosaic_0001>

<llo_original>
// kernel: tpu_custom_call.1
$region0: #{tpu_custom_call.1}
  #allocation0 [shape = 'u32[]', space=smem, size = 0x4, offset = 0x4, fixed_abs, tag = 'smem constant byte address 0x4 - core index']
  #allocation1 [shape = 'u32[144,128]{1,0:T(1,128)}', space=vmem, size = 0x12000, scoped, tag = 'internal scratch']
  %s0 = inlined_call_operand.hbm [shape: f32[2,256], index: 0, kind: input, shape index: {}]
  %s1 = inlined_call_operand.vmem [shape: f32[1,256], index: 1, kind: input, shape index: {}]
  %s2 = inlined_call_operand.hbm [shape: f32[2,256], index: 2, kind: output, shape index: {}]
  %s3 = sld [smem:[#allocation0]]
  $region22: #{tpu_custom_call.1} parent=0
    _
  %s5 = ssub.s32 1, %s3
  %s6 = scalar_select 0, %s5, %s3
  $region1: #{tpu_custom_call.1} parent=0
    #allocation2 [shape = 'u8[2048]{0}', space=vmem, size = 0x800, scoped, tag = 'input window, operand 0, single buffered']
    #allocation3 [shape = 's32[1]{0}', space=sflag, size = 0x4, scoped, tag = 'scoped memory for tpu_custom_call.1']
    #allocation4 [shape = 's32[1]{0}', space=sflag, size = 0x4, scoped, tag = 'scoped memory for tpu_custom_call.1']
    #allocation5 [shape = 'u8[2048]{0}', space=vmem, size = 0x800, scoped, tag = 'output window, operand 0, single buffered']
    %7 = vsyncpa [#allocation3], 0
    %8 = vsyncpa [#allocation4], 0
    // Predicated region
    $region2: #{tpu_custom_call.1} parent=1 // pred_check
      _
    $region3: #{tpu_custom_call.1} parent=1 // pred_check_branch
      %10 = sbr.rel (0) target = $region5
    $region4: #{tpu_custom_call.1} parent=1 // pred_region
      %s12 = ssub.s32 64, 64
      %13 = vsyncadd [#allocation3], %s12
      %s15 = sshll.u32 [#allocation2], 4
      %s16 = int_to_ptr.vmem [resolvable:$true] %s15
      %18 = dma.hbm_to_vmem [thread:$0]  %s0, 64, %s16, [#allocation3]
    $region5: #{tpu_custom_call.1} parent=1 // pred_fallthru
      _
    // Predicated region
    $region6: #{tpu_custom_call.1} parent=1 // pred_check
      _
    $region7: #{tpu_custom_call.1} parent=1 // pred_check_branch
      %20 = sbr.rel (0) target = $region9
    $region8: #{tpu_custom_call.1} parent=1 // pred_region
      _
    $region9: #{tpu_custom_call.1} parent=1 // pred_fallthru
      _
    // Predicated region
    $region10: #{tpu_custom_call.1} parent=1 // pred_check
      _
    $region11: #{tpu_custom_call.1} parent=1 // pred_check_branch
      %22 = sbr.rel (0) target = $region13
    $region12: #{tpu_custom_call.1} parent=1 // pred_region
      %23 = dma.done [#allocation3], 64
    $region13: #{tpu_custom_call.1} parent=1 // pred_fallthru
      _
    %v24 = vld [vmem:[#allocation2] sm:$0xf]
    %v25 = vld [vmem:[%s1] sm:$0x3]
    %v27 = vlaneseq
    %v28 = vshrl.u32 %v27, 7
    %v29 = vsub.s32 0, %v28
    %v30 = vrot.slane %v25, %v29
    %v31 = vlaneseq
    %v32 = vshrl.u32 %v31, 7
    %v33 = vsub.s32 1, %v32
    %v34 = vrot.slane %v25, %v33
    %v35 = vcombine.low %v30, %v34
    %v37 = vunpack.c.l.s4 1983009808
    %v38 = vunpack.c.0.s8 %v37
    %v39 = vlaneseq
    %v40 = vshrl.u32 %v39, 7
    %v41 = vsub.s32 %v38, %v40
    %v42 = vrot.slane %v35, %v41
    %v44 = vadd.f32 %v24, %v42
    %45 = vst [vmem:[#allocation5] sm:$0xf] %v44
    // Predicated region
    $region14: #{tpu_custom_call.1} parent=1 // pred_check
      _
    $region15: #{tpu_custom_call.1} parent=1 // pred_check_branch
      %47 = sbr.rel (0) target = $region17
    $region16: #{tpu_custom_call.1} parent=1 // pred_region
      %s49 = ssub.s32 64, 64
      %50 = vsyncadd [#allocation4], %s49
      %s52 = sshll.u32 [#allocation5], 4
      %s53 = int_to_ptr.vmem [resolvable:$true] %s52
      %55 = dma.vmem_to_hbm [thread:$0]  %s53, 64, %s2, [#allocation4]
    $region17: #{tpu_custom_call.1} parent=1 // pred_fallthru
      _
    // Predicated region
    $region18: #{tpu_custom_call.1} parent=1 // pred_check
      _
    $region19: #{tpu_custom_call.1} parent=1 // pred_check_branch
      %57 = sbr.rel (0) target = $region21
    $region20: #{tpu_custom_call.1} parent=1 // pred_region
      %58 = dma.done [#allocation4], 64
    $region21: #{tpu_custom_call.1} parent=1 // pred_fallthru
      _
    %59 = vsyncpa [#allocation3], 1
    %60 = vsyncpa [#allocation4], 1

</llo_original>
